<compile_context>
chip_gen: v5e
topology: v5e:2x2
jax: 0.10.0
libtpu: 0.0.40
codegen_flags: <defaults>
</compile_context>

<pallas_src>
import functools

import jax
import jax.numpy as jnp
from jax import lax
from jax.experimental import pallas as pl
from jax.experimental.pallas import tpu as pltpu

EPS = 1e-8          # matches GlobLN(nOut) = GroupNorm(1, nOut, eps=1e-8)
LANE = 128
MAX_B_TILE = 64     # bounds in-kernel unrolling / trace size


def _round_up(x, m):
    return -(-x // m) * m


def _vmem_capacity_bytes():
    try:
        cap = int(pltpu.get_tpu_info().vmem_capacity_bytes)
        return cap if cap > 0 else 128 << 20
    except Exception:
        return 128 << 20


def _dilated_conv_norm_kernel(
    x_ref, w_ref, b_ref, g_ref, beta_ref, o_ref, *,
    k_taps, stride, dilation, t_valid, t_in_pad, t_out_pad,
):
    # x_ref    : (C_in_pad, B_TILE*T_in_pad)   bf16/f32  channel-major padded input
    # w_ref    : (C_out, K*C_in_pad)           bf16/f32  folded conv weights
    # b_ref    : (C_out, 1)  f32               conv bias
    # g_ref    : (C_out, 1)  f32               norm gamma
    # beta_ref : (C_out, 1)  f32               norm beta
    # o_ref    : (C_out, B_TILE*T_out_pad)     out_dtype
    c_in_pad = x_ref.shape[0]
    c_out = o_ref.shape[0]
    b_tile = o_ref.shape[1] // t_out_pad
    span = (t_out_pad - 1) * stride + 1

    w = w_ref[...]                       # (C_out, K*C_in_pad)
    bias = b_ref[...]                    # (C_out, 1), broadcasts over lanes
    gamma = g_ref[...]
    beta = beta_ref[...]

    # ---- conv: ONE wide MXU contraction over all K taps and all B_TILE samples ----
    cols = []
    for i in range(b_tile):              # static & bounded -> unrolled
        # aligned per-sample window load (offset is a multiple of 128 lanes)
        xi = x_ref[:, i * t_in_pad:i * t_in_pad + t_in_pad]   # (C_in_pad, T_in_pad)
        taps = []
        for k in range(k_taps):
            start = k * dilation
            if stride == 1:
                taps.append(xi[:, start:start + span])
            else:
                # only traced when stride > 1 (down-sampling configs)
                taps.append(
                    lax.slice(xi, (0, start), (c_in_pad, start + span), (1, stride))
                )
        # sublane-aligned concat (each piece is C_in_pad rows = a whole granule)
        cols.append(taps[0] if k_taps == 1 else jnp.concatenate(taps, axis=0))
    # lane-aligned concat (each piece is T_out_pad = multiple of 128 lanes)
    xm = cols[0] if b_tile == 1 else jnp.concatenate(cols, axis=1)
    # xm: (K*C_in_pad, B_TILE*T_out_pad)

    acc = jnp.dot(w, xm, preferred_element_type=jnp.float32) + bias
    # acc: (C_out, B_TILE*T_out_pad) f32

    # ---- GroupNorm(1, C): per-sample one-pass stats over the valid region ----
    col_idx = lax.broadcasted_iota(jnp.int32, (c_out, t_out_pad), 1)
    valid = col_idx < t_valid
    inv_n = 1.0 / float(c_out * t_valid)

    for i in range(b_tile):
        lo = i * t_out_pad
        a_i = acc[:, lo:lo + t_out_pad]                  # lane-aligned static slice
        av = jnp.where(valid, a_i, 0.0)
        # lane-reduce first (keepdims), finish with tiny cross-sublane reduce
        s1 = jnp.sum(av, axis=1, keepdims=True)          # (C_out, 1)
        s2 = jnp.sum(av * av, axis=1, keepdims=True)     # (C_out, 1)
        mean = jnp.sum(s1) * inv_n
        ex2 = jnp.sum(s2) * inv_n
        var = jnp.maximum(ex2 - mean * mean, 0.0)
        xhat = (a_i - mean) * lax.rsqrt(var + EPS)
        o_ref[:, lo:lo + t_out_pad] = (gamma * xhat + beta).astype(o_ref.dtype)


def dilated_conv_norm(
    x, weight, bias, gamma, beta, *, stride=1, dilation=1, groups=1,
    compute_dtype=jnp.bfloat16, out_dtype=None,
):
    """x: (B, C_in, T) float32 (NCL).  Returns (B, C_out, T_out) in out_dtype."""
    assert groups == 1  # TODO(synk): grouped conv (block-diagonal weight) not implemented
    out_dtype = compute_dtype if out_dtype is None else out_dtype

    B, C_in, T = x.shape
    C_out, _, K = weight.shape
    pad = (K - 1) // 2 * dilation
    halo = dilation * (K - 1)
    T_out = (T + 2 * pad - halo - 1) // stride + 1

    # lane-dense stored time dim; input window rounded so per-sample segments are
    # 128-aligned inside the wide channel-major layout
    T_out_pad = _round_up(T_out, LANE)
    span = (T_out_pad - 1) * stride + 1
    T_in_pad = _round_up(span + halo, LANE)

    itemsize = jnp.dtype(compute_dtype).itemsize
    out_itemsize = jnp.dtype(out_dtype).itemsize
    sub = 16 if itemsize == 2 else 8          # sublane granule (bf16 packs x2)
    C_in_pad = _round_up(C_in, sub)

    # ---- generation-aware batch tiling ----
    vmem_cap = _vmem_capacity_bytes()
    per_sample = C_in_pad * T_in_pad * itemsize + C_out * T_out_pad * out_itemsize
    target_block = vmem_cap // 8              # ~16 MiB on 128-MiB parts, ~8 MiB on v7x
    bt = int(max(1, min(B, MAX_B_TILE, target_block // max(per_sample, 1))))
    if vmem_cap <= (64 << 20) and B >= 2:
        # v7x (2 TCs/chip, 64 MiB VMEM/TC): keep >= 2 "parallel" grid steps
        bt = min(bt, -(-B // 2))
    # prefer a divisor of B: no padded garbage samples computed or written back
    div = 1
    for cand in range(bt, 0, -1):
        if B % cand == 0:
            div = cand
            break
    if div >= max(1, bt // 2):
        bt = div
    B_TILE = bt
    B_pad = _round_up(B, B_TILE)

    # ---- glue (pure layout): pad, channel-major reshape, fold weights ----
    x_p = jnp.pad(x, ((0, B_pad - B), (0, C_in_pad - C_in), (pad, pad)))
    cur = x_p.shape[-1]
    if cur < T_in_pad:
        x_p = jnp.pad(x_p, ((0, 0), (0, 0), (0, T_in_pad - cur)))
    else:
        x_p = x_p[:, :, :T_in_pad]            # trailing cols never start a window
    # (B_pad, C_in_pad, T_in_pad) -> (C_in_pad, B_pad*T_in_pad)
    x2 = jnp.transpose(x_p, (1, 0, 2)).reshape(C_in_pad, B_pad * T_in_pad)
    x2 = x2.astype(compute_dtype)

    # weight[o, c, k] -> w_fold[o, k*C_in_pad + c]; padded channel columns are zero
    w_fold = jnp.zeros((C_out, K, C_in_pad), compute_dtype)
    w_fold = w_fold.at[:, :, :C_in].set(
        jnp.transpose(weight, (0, 2, 1)).astype(compute_dtype))
    w_fold = w_fold.reshape(C_out, K * C_in_pad)

    b2 = bias.reshape(C_out, 1).astype(jnp.float32)
    g2 = gamma.reshape(C_out, 1).astype(jnp.float32)
    be2 = beta.reshape(C_out, 1).astype(jnp.float32)

    # ---- explicit VMEM budget (double-buffered blocks + working set) ----
    in_block = C_in_pad * B_TILE * T_in_pad * itemsize
    out_block = C_out * B_TILE * T_out_pad * out_itemsize
    work = (K * C_in_pad * B_TILE * T_out_pad * itemsize      # xm operand
            + 2 * C_out * B_TILE * T_out_pad * 4)             # f32 acc + temps
    vmem_bytes = 2 * (in_block + out_block) + work + w_fold.size * itemsize + 3 * C_out * 4
    vmem_limit = int(min(max(2 * vmem_bytes, 32 << 20), (vmem_cap * 3) // 4))

    kernel = functools.partial(
        _dilated_conv_norm_kernel,
        k_taps=K, stride=stride, dilation=dilation, t_valid=T_out,
        t_in_pad=T_in_pad, t_out_pad=T_out_pad,
    )
    out2 = pl.pallas_call(
        kernel,
        out_shape=jax.ShapeDtypeStruct((C_out, B_pad * T_out_pad), out_dtype),
        grid_spec=pltpu.PrefetchScalarGridSpec(
            num_scalar_prefetch=0,
            grid=(B_pad // B_TILE,),
            in_specs=[
                pl.BlockSpec((C_in_pad, B_TILE * T_in_pad), lambda b: (0, b)),
                pl.BlockSpec((C_out, K * C_in_pad), lambda b: (0, 0)),
                pl.BlockSpec((C_out, 1), lambda b: (0, 0)),
                pl.BlockSpec((C_out, 1), lambda b: (0, 0)),
                pl.BlockSpec((C_out, 1), lambda b: (0, 0)),
            ],
            out_specs=pl.BlockSpec((C_out, B_TILE * T_out_pad), lambda b: (0, b)),
        ),
        compiler_params=pltpu.CompilerParams(
            dimension_semantics=("parallel",),
            vmem_limit_bytes=vmem_limit,
        ),
    )(x2, w_fold, b2, g2, be2)

    # (C_out, B_pad*T_out_pad) -> (B, C_out, T_out)
    out = out2.reshape(C_out, B_pad, T_out_pad).transpose(1, 0, 2)
    return out[:B, :, :T_out]


def _reference(x, weight, bias, gamma, beta, *, stride=1, dilation=1):
    K = weight.shape[2]
    pad = (K - 1) // 2 * dilation
    y = lax.conv_general_dilated(
        x, weight, window_strides=(stride,), padding=[(pad, pad)],
        rhs_dilation=(dilation,), dimension_numbers=("NCH", "OIH", "NCH"),
    )
    y = y + bias[None, :, None]
    mean = y.mean(axis=(1, 2), keepdims=True)
    var = ((y - mean) ** 2).mean(axis=(1, 2), keepdims=True)
    return gamma[None, :, None] * (y - mean) / jnp.sqrt(var + EPS) + beta[None, :, None]


if __name__ == "__main__":

    def _check(B, nIn, nOut, kSize, T, stride, d, seed=0):
        key = jax.random.PRNGKey(seed)
        kx, kw, kb, kg, kbe = jax.random.split(key, 5)
        x = jax.random.normal(kx, (B, nIn, T), dtype=jnp.float32)
        weight = jax.random.normal(kw, (nOut, nIn, kSize), dtype=jnp.float32) * 0.2
        bias = jax.random.normal(kb, (nOut,), dtype=jnp.float32) * 0.1
        gamma = 1.0 + 0.1 * jax.random.normal(kg, (nOut,), dtype=jnp.float32)
        beta = 0.1 * jax.random.normal(kbe, (nOut,), dtype=jnp.float32)
        ref = _reference(x, weight, bias, gamma, beta, stride=stride, dilation=d)

        # f32 compute + f32 output: tight check against the f32 reference
        out32 = jax.block_until_ready(
            dilated_conv_norm(x, weight, bias, gamma, beta, stride=stride,
                              dilation=d, compute_dtype=jnp.float32)
        )
        assert out32.shape == ref.shape
        assert jnp.allclose(out32, ref, atol=1e-4, rtol=1e-4)

        # bf16 matmul + bf16 writeback (performance default): looser tolerance
        outbf = jax.block_until_ready(
            dilated_conv_norm(x, weight, bias, gamma, beta, stride=stride, dilation=d)
        )
        assert outbf.shape == ref.shape
        assert jnp.allclose(outbf.astype(jnp.float32), ref, atol=5e-2, rtol=5e-2)

    # Module config: nIn=4, nOut=8, kSize=3, stride=1, d=1, groups=1
    _check(B=2, nIn=4, nOut=8, kSize=3, T=16, stride=1, d=1, seed=0)
    # dilated variant (d=2) at a slightly different shape
    _check(B=3, nIn=6, nOut=8, kSize=3, T=50, stride=1, d=2, seed=1)
    print("KERNEL_OK")
</pallas_src>

<mosaic_0001>
module attributes {stable_mosaic.version = 11 : i64} {
  func.func @_dilated_conv_norm_kernel(%arg0: i32, %arg1: memref<8x512xf32, #tpu.memory_space<vmem>>, %arg2: memref<8x24xf32, #tpu.memory_space<vmem>>, %arg3: memref<8x1xf32, #tpu.memory_space<vmem>>, %arg4: memref<8x1xf32, #tpu.memory_space<vmem>>, %arg5: memref<8x1xf32, #tpu.memory_space<vmem>>, %arg6: memref<8x256xf32, #tpu.memory_space<vmem>>) attributes {dimension_semantics = [#tpu.dimension_semantics<parallel>], iteration_bounds = array<i64: 1>, scalar_prefetch = 0 : i64, scratch_operands = 0 : i64, tpu.core_type = #tpu.core_type<tc>, window_params = [{transform_indices = @transform_0, window_bounds = array<i64: 8, 512>}, {pipeline_mode = #tpu.pipeline_mode<synchronous>, transform_indices = @transform_1, window_bounds = array<i64: 8, 24>}, {pipeline_mode = #tpu.pipeline_mode<synchronous>, transform_indices = @transform_2, window_bounds = array<i64: 8, 1>}, {pipeline_mode = #tpu.pipeline_mode<synchronous>, transform_indices = @transform_3, window_bounds = array<i64: 8, 1>}, {pipeline_mode = #tpu.pipeline_mode<synchronous>, transform_indices = @transform_4, window_bounds = array<i64: 8, 1>}, {transform_indices = @transform_5, window_bounds = array<i64: 8, 256>}]} {
    %c0 = arith.constant 0 : index
    %c0_0 = arith.constant 0 : index
    %0 = vector.load %arg2[%c0, %c0_0] : memref<8x24xf32, #tpu.memory_space<vmem>>, vector<8x24xf32>
    %c0_1 = arith.constant 0 : index
    %c0_2 = arith.constant 0 : index
    %1 = vector.load %arg3[%c0_1, %c0_2] : memref<8x1xf32, #tpu.memory_space<vmem>>, vector<8x1xf32>
    %c0_3 = arith.constant 0 : index
    %c0_4 = arith.constant 0 : index
    %2 = vector.load %arg4[%c0_3, %c0_4] : memref<8x1xf32, #tpu.memory_space<vmem>>, vector<8x1xf32>
    %c0_5 = arith.constant 0 : index
    %c0_6 = arith.constant 0 : index
    %3 = vector.load %arg5[%c0_5, %c0_6] : memref<8x1xf32, #tpu.memory_space<vmem>>, vector<8x1xf32>
    %c0_7 = arith.constant 0 : index
    %c0_8 = arith.constant 0 : index
    %4 = vector.load %arg1[%c0_7, %c0_8] : memref<8x512xf32, #tpu.memory_space<vmem>>, vector<8x256xf32>
    %5 = vector.extract_strided_slice %4 {offsets = [0, 0], sizes = [8, 128], strides = [1, 1]} : vector<8x256xf32> to vector<8x128xf32>
    %6 = vector.extract_strided_slice %4 {offsets = [0, 1], sizes = [8, 128], strides = [1, 1]} : vector<8x256xf32> to vector<8x128xf32>
    %7 = vector.extract_strided_slice %4 {offsets = [0, 2], sizes = [8, 128], strides = [1, 1]} : vector<8x256xf32> to vector<8x128xf32>
    %8 = tpu.concatenate %5, %6, %7 in 0 : vector<8x128xf32>, vector<8x128xf32>, vector<8x128xf32> -> vector<24x128xf32>
    %c0_9 = arith.constant 0 : index
    %c256 = arith.constant 256 : index
    %9 = vector.load %arg1[%c0_9, %c256] : memref<8x512xf32, #tpu.memory_space<vmem>>, vector<8x256xf32>
    %10 = vector.extract_strided_slice %9 {offsets = [0, 0], sizes = [8, 128], strides = [1, 1]} : vector<8x256xf32> to vector<8x128xf32>
    %11 = vector.extract_strided_slice %9 {offsets = [0, 1], sizes = [8, 128], strides = [1, 1]} : vector<8x256xf32> to vector<8x128xf32>
    %12 = vector.extract_strided_slice %9 {offsets = [0, 2], sizes = [8, 128], strides = [1, 1]} : vector<8x256xf32> to vector<8x128xf32>
    %13 = tpu.concatenate %10, %11, %12 in 0 : vector<8x128xf32>, vector<8x128xf32>, vector<8x128xf32> -> vector<24x128xf32>
    %14 = tpu.concatenate %8, %13 in 1 : vector<24x128xf32>, vector<24x128xf32> -> vector<24x256xf32>
    %cst = arith.constant dense<0.000000e+00> : vector<8x256xf32>
    %15 = tpu.matmul %0, %14, %cst {dimension_numbers = #tpu.dot_dimension_numbers<[1], [0], [0], [1], [0, 0, 1, 1], [], []>} : vector<8x24xf32>, vector<24x256xf32>, vector<8x256xf32> -> vector<8x256xf32>
    %16 = vector.broadcast %1 : vector<8x1xf32> to vector<8x256xf32>
    %17 = arith.addf %15, %16 : vector<8x256xf32>
    %18 = tpu.iota {dimensions = array<i32: 1>} : vector<8x128xi32>
    %c16_i32 = arith.constant 16 : i32
    %19 = vector.broadcast %c16_i32 : i32 to vector<8x128xi32>
    %20 = arith.cmpi slt, %18, %19 : vector<8x128xi32>
    %21 = vector.extract_strided_slice %17 {offsets = [0, 0], sizes = [8, 128], strides = [1, 1]} : vector<8x256xf32> to vector<8x128xf32>
    %cst_10 = arith.constant 0.000000e+00 : f32
    %22 = vector.broadcast %cst_10 : f32 to vector<8x128xf32>
    %23 = arith.select %20, %21, %22 : vector<8x128xi1>, vector<8x128xf32>
    %cst_11 = arith.constant dense<0.000000e+00> : vector<8xf32>
    %24 = vector.multi_reduction <add>, %23, %cst_11 [1] : vector<8x128xf32> to vector<8xf32>
    %25 = vector.shape_cast %24 : vector<8xf32> to vector<8x1xf32>
    %26 = arith.mulf %23, %23 : vector<8x128xf32>
    %cst_12 = arith.constant dense<0.000000e+00> : vector<8xf32>
    %27 = vector.multi_reduction <add>, %26, %cst_12 [1] : vector<8x128xf32> to vector<8xf32>
    %28 = vector.shape_cast %27 : vector<8xf32> to vector<8x1xf32>
    %29 = vector.shape_cast %25 : vector<8x1xf32> to vector<1x8x1xf32>
    %cst_13 = arith.constant dense<0.000000e+00> : vector<1xf32>
    %30 = vector.multi_reduction <add>, %29, %cst_13 [1, 2] : vector<1x8x1xf32> to vector<1xf32>
    %31 = vector.shape_cast %30 : vector<1xf32> to vector<1x1x1xf32>
    %32 = vector.extract %31[0, 0, 0] : f32 from vector<1x1x1xf32>
    %cst_14 = arith.constant 7.812500e-03 : f32
    %33 = arith.mulf %32, %cst_14 : f32
    %34 = vector.shape_cast %28 : vector<8x1xf32> to vector<1x8x1xf32>
    %cst_15 = arith.constant dense<0.000000e+00> : vector<1xf32>
    %35 = vector.multi_reduction <add>, %34, %cst_15 [1, 2] : vector<1x8x1xf32> to vector<1xf32>
    %36 = vector.shape_cast %35 : vector<1xf32> to vector<1x1x1xf32>
    %37 = vector.extract %36[0, 0, 0] : f32 from vector<1x1x1xf32>
    %cst_16 = arith.constant 7.812500e-03 : f32
    %38 = arith.mulf %37, %cst_16 : f32
    %39 = arith.mulf %33, %33 : f32
    %40 = arith.subf %38, %39 : f32
    %cst_17 = arith.constant 0.000000e+00 : f32
    %41 = arith.maximumf %40, %cst_17 : f32
    %42 = vector.broadcast %33 : f32 to vector<8x128xf32>
    %43 = arith.subf %21, %42 : vector<8x128xf32>
    %cst_18 = arith.constant 9.99999993E-9 : f32
    %44 = arith.addf %41, %cst_18 : f32
    %45 = math.rsqrt %44 : f32
    %46 = vector.broadcast %45 : f32 to vector<8x128xf32>
    %47 = arith.mulf %43, %46 : vector<8x128xf32>
    %48 = vector.broadcast %2 : vector<8x1xf32> to vector<8x128xf32>
    %49 = arith.mulf %48, %47 : vector<8x128xf32>
    %50 = vector.broadcast %3 : vector<8x1xf32> to vector<8x128xf32>
    %51 = arith.addf %49, %50 : vector<8x128xf32>
    %c0_19 = arith.constant 0 : index
    %c0_20 = arith.constant 0 : index
    %52 = vector.load %arg6[%c0_19, %c0_20] : memref<8x256xf32, #tpu.memory_space<vmem>>, vector<8x128xf32>
    tpu.vector_store %arg6[%c0_19, %c0_20], %51 {strides = array<i32>} : memref<8x256xf32, #tpu.memory_space<vmem>>, vector<8x128xf32>,
    %53 = vector.extract_strided_slice %17 {offsets = [0, 128], sizes = [8, 128], strides = [1, 1]} : vector<8x256xf32> to vector<8x128xf32>
    %cst_21 = arith.constant 0.000000e+00 : f32
    %54 = vector.broadcast %cst_21 : f32 to vector<8x128xf32>
    %55 = arith.select %20, %53, %54 : vector<8x128xi1>, vector<8x128xf32>
    %cst_22 = arith.constant dense<0.000000e+00> : vector<8xf32>
    %56 = vector.multi_reduction <add>, %55, %cst_22 [1] : vector<8x128xf32> to vector<8xf32>
    %57 = vector.shape_cast %56 : vector<8xf32> to vector<8x1xf32>
    %58 = arith.mulf %55, %55 : vector<8x128xf32>
    %cst_23 = arith.constant dense<0.000000e+00> : vector<8xf32>
    %59 = vector.multi_reduction <add>, %58, %cst_23 [1] : vector<8x128xf32> to vector<8xf32>
    %60 = vector.shape_cast %59 : vector<8xf32> to vector<8x1xf32>
    %61 = vector.shape_cast %57 : vector<8x1xf32> to vector<1x8x1xf32>
    %cst_24 = arith.constant dense<0.000000e+00> : vector<1xf32>
    %62 = vector.multi_reduction <add>, %61, %cst_24 [1, 2] : vector<1x8x1xf32> to vector<1xf32>
    %63 = vector.shape_cast %62 : vector<1xf32> to vector<1x1x1xf32>
    %64 = vector.extract %63[0, 0, 0] : f32 from vector<1x1x1xf32>
    %cst_25 = arith.constant 7.812500e-03 : f32
    %65 = arith.mulf %64, %cst_25 : f32
    %66 = vector.shape_cast %60 : vector<8x1xf32> to vector<1x8x1xf32>
    %cst_26 = arith.constant dense<0.000000e+00> : vector<1xf32>
    %67 = vector.multi_reduction <add>, %66, %cst_26 [1, 2] : vector<1x8x1xf32> to vector<1xf32>
    %68 = vector.shape_cast %67 : vector<1xf32> to vector<1x1x1xf32>
    %69 = vector.extract %68[0, 0, 0] : f32 from vector<1x1x1xf32>
    %cst_27 = arith.constant 7.812500e-03 : f32
    %70 = arith.mulf %69, %cst_27 : f32
    %71 = arith.mulf %65, %65 : f32
    %72 = arith.subf %70, %71 : f32
    %cst_28 = arith.constant 0.000000e+00 : f32
    %73 = arith.maximumf %72, %cst_28 : f32
    %74 = vector.broadcast %65 : f32 to vector<8x128xf32>
    %75 = arith.subf %53, %74 : vector<8x128xf32>
    %cst_29 = arith.constant 9.99999993E-9 : f32
    %76 = arith.addf %73, %cst_29 : f32
    %77 = math.rsqrt %76 : f32
    %78 = vector.broadcast %77 : f32 to vector<8x128xf32>
    %79 = arith.mulf %75, %78 : vector<8x128xf32>
    %80 = vector.broadcast %2 : vector<8x1xf32> to vector<8x128xf32>
    %81 = arith.mulf %80, %79 : vector<8x128xf32>
    %82 = vector.broadcast %3 : vector<8x1xf32> to vector<8x128xf32>
    %83 = arith.addf %81, %82 : vector<8x128xf32>
    %c0_30 = arith.constant 0 : index
    %c128 = arith.constant 128 : index
    %84 = vector.load %arg6[%c0_30, %c128] : memref<8x256xf32, #tpu.memory_space<vmem>>, vector<8x128xf32>
    tpu.vector_store %arg6[%c0_30, %c128], %83 {strides = array<i32>} : memref<8x256xf32, #tpu.memory_space<vmem>>, vector<8x128xf32>,
    return
  }
  func.func @transform_0(%arg0: i32) -> (i32, i32) {
    %c0_i32 = arith.constant 0 : i32
    %c0_i32_0 = arith.constant 0 : i32
    return %c0_i32, %arg0 : i32, i32
  }
  func.func @transform_1(%arg0: i32) -> (i32, i32) {
    %c0_i32 = arith.constant 0 : i32
    %c0_i32_0 = arith.constant 0 : i32
    %c0_i32_1 = arith.constant 0 : i32
    return %c0_i32, %c0_i32_0 : i32, i32
  }
  func.func @transform_2(%arg0: i32) -> (i32, i32) {
    %c0_i32 = arith.constant 0 : i32
    %c0_i32_0 = arith.constant 0 : i32
    %c0_i32_1 = arith.constant 0 : i32
    return %c0_i32, %c0_i32_0 : i32, i32
  }
  func.func @transform_3(%arg0: i32) -> (i32, i32) {
    %c0_i32 = arith.constant 0 : i32
    %c0_i32_0 = arith.constant 0 : i32
    %c0_i32_1 = arith.constant 0 : i32
    return %c0_i32, %c0_i32_0 : i32, i32
  }
  func.func @transform_4(%arg0: i32) -> (i32, i32) {
    %c0_i32 = arith.constant 0 : i32
    %c0_i32_0 = arith.constant 0 : i32
    %c0_i32_1 = arith.constant 0 : i32
    return %c0_i32, %c0_i32_0 : i32, i32
  }
  func.func @transform_5(%arg0: i32) -> (i32, i32) {
    %c0_i32 = arith.constant 0 : i32
    %c0_i32_0 = arith.constant 0 : i32
    return %c0_i32, %arg0 : i32, i32
  }
}

</mosaic_0001>

<llo_original>
// kernel: tpu_custom_call.1
$region0: #{tpu_custom_call.1}
  #allocation0 [shape = 'u32[]', space=smem, size = 0x4, offset = 0x4, fixed_abs, tag = 'smem constant byte address 0x4 - core index']
  #allocation1 [shape = 'u32[72,128]{1,0:T(1,128)}', space=vmem, size = 0x9000, scoped, tag = 'internal scratch']
  %s0 = inlined_call_operand.hbm [shape: f32[8,512], index: 0, kind: input, shape index: {}]
  %s1 = inlined_call_operand.vmem [shape: f32[8,24], index: 1, kind: input, shape index: {}]
  %s2 = inlined_call_operand.vmem [shape: f32[8,1], index: 2, kind: input, shape index: {}]
  %s3 = inlined_call_operand.vmem [shape: f32[8,1], index: 3, kind: input, shape index: {}]
  %s4 = inlined_call_operand.vmem [shape: f32[8,1], index: 4, kind: input, shape index: {}]
  %s5 = inlined_call_operand.hbm [shape: f32[8,256], index: 5, kind: output, shape index: {}]
  %s6 = sld [smem:[#allocation0]]
  $region34: #{tpu_custom_call.1} parent=0
    _
  %s8 = ssub.s32 1, %s6
  %s9 = scalar_select 0, %s8, %s6
  $region1: #{tpu_custom_call.1} parent=0
    #allocation2 [shape = 'u8[16384]{0}', space=vmem, size = 0x4000, scoped, tag = 'input window, operand 0, single buffered']
    #allocation3 [shape = 's32[1]{0}', space=sflag, size = 0x4, scoped, tag = 'scoped memory for tpu_custom_call.1']
    #allocation4 [shape = 's32[1]{0}', space=sflag, size = 0x4, scoped, tag = 'scoped memory for tpu_custom_call.1']
    #allocation5 [shape = 'u8[8192]{0}', space=vmem, size = 0x2000, scoped, tag = 'output window, operand 0, single buffered']
    %10 = vsyncpa [#allocation3], 0
    %11 = vsyncpa [#allocation4], 0
    // Predicated region
    $region2: #{tpu_custom_call.1} parent=1 // pred_check
      _
    $region3: #{tpu_custom_call.1} parent=1 // pred_check_branch
      %13 = sbr.rel (0) target = $region5
    $region4: #{tpu_custom_call.1} parent=1 // pred_region
      %15 = vsyncadd [#allocation3], 0
      %s17 = sshll.u32 %s0, 4
      %s18 = int_to_ptr.hbm [resolvable:$true] %s17
      %s19 = sshll.u32 [#allocation2], 4
      %s20 = int_to_ptr.vmem [resolvable:$true] %s19
      %22 = dma.hbm_to_vmem [thread:$0]  %s18, 512, %s20, [#allocation3]
    $region5: #{tpu_custom_call.1} parent=1 // pred_fallthru
      _
    // Predicated region
    $region6: #{tpu_custom_call.1} parent=1 // pred_check
      _
    $region7: #{tpu_custom_call.1} parent=1 // pred_check_branch
      %24 = sbr.rel (0) target = $region9
    $region8: #{tpu_custom_call.1} parent=1 // pred_region
      _
    $region9: #{tpu_custom_call.1} parent=1 // pred_fallthru
      _
    // Predicated region
    $region10: #{tpu_custom_call.1} parent=1 // pred_check
      _
    $region11: #{tpu_custom_call.1} parent=1 // pred_check_branch
      %26 = sbr.rel (0) target = $region13
    $region12: #{tpu_custom_call.1} parent=1 // pred_region
      _
    $region13: #{tpu_custom_call.1} parent=1 // pred_fallthru
      _
    // Predicated region
    $region14: #{tpu_custom_call.1} parent=1 // pred_check
      _
    $region15: #{tpu_custom_call.1} parent=1 // pred_check_branch
      %28 = sbr.rel (0) target = $region17
    $region16: #{tpu_custom_call.1} parent=1 // pred_region
      _
    $region17: #{tpu_custom_call.1} parent=1 // pred_fallthru
      _
    // Predicated region
    $region18: #{tpu_custom_call.1} parent=1 // pred_check
      _
    $region19: #{tpu_custom_call.1} parent=1 // pred_check_branch
      %30 = sbr.rel (0) target = $region21
    $region20: #{tpu_custom_call.1} parent=1 // pred_region
      _
    $region21: #{tpu_custom_call.1} parent=1 // pred_fallthru
      _
    // Predicated region
    $region22: #{tpu_custom_call.1} parent=1 // pred_check
      _
    $region23: #{tpu_custom_call.1} parent=1 // pred_check_branch
      %32 = sbr.rel (0) target = $region25
    $region24: #{tpu_custom_call.1} parent=1 // pred_region
      %34 = dma.done [#allocation3], 512
    $region25: #{tpu_custom_call.1} parent=1 // pred_fallthru
      _
    %v35 = vld [vmem:[%s1] sm:$0xff]
    %v36 = vld [vmem:[%s2] sm:$0xff]
    %v37 = vld [vmem:[%s3] sm:$0xff]
    %v38 = vld [vmem:[%s4] sm:$0xff]
    %v39 = vld [vmem:[#allocation2] sm:$0xff]
    %v40 = vld [vmem:[#allocation2 + $0x8] sm:$0xff]
    %43 = vrot.lane.b32.xlu0 %v39, 127
    %v44 = vpop.permute.xlu0 %43
    %45 = vrot.lane.b32.xlu0 %v40, 127
    %v46 = vpop.permute.xlu0 %45
    %vm47 = vcmask 1039360
    %v48 = vsel %vm47, %v44, %v46
    %50 = vrot.lane.b32.xlu0 %v39, 126
    %v51 = vpop.permute.xlu0 %50
    %52 = vrot.lane.b32.xlu0 %v40, 126
    %v53 = vpop.permute.xlu0 %52
    %vm54 = vcmask 1031168
    %v55 = vsel %vm54, %v51, %v53
    %v57 = vld [vmem:[#allocation2 + $0x10] sm:$0xff]
    %v58 = vld [vmem:[#allocation2 + $0x18] sm:$0xff]
    %61 = vrot.lane.b32.xlu0 %v57, 127
    %v62 = vpop.permute.xlu0 %61
    %63 = vrot.lane.b32.xlu0 %v58, 127
    %v64 = vpop.permute.xlu0 %63
    %v65 = vsel %vm47, %v62, %v64
    %67 = vrot.lane.b32.xlu0 %v57, 126
    %v68 = vpop.permute.xlu0 %67
    %69 = vrot.lane.b32.xlu0 %v58, 126
    %v70 = vpop.permute.xlu0 %69
    %v71 = vsel %vm54, %v68, %v70
    %74 = vset.pattern.permute.xlu0 0
    %75 = vperm.xlu0 %74, %v36
    %v76 = vpop.permute.xlu0 %75
    %vm78 = vcmask 195584
    %v80 = vsel %vm78, %v35, 0
    %82 = vmatpush.msra.mxu0 0.0
    %83 = vmatpush.msra.mxu0 0.0
    %84 = vmatpush.msra.mxu0 0.0
    %85 = vmatpush.msra.mxu0 0.0
    %86 = vmatpush.msra.mxu0 0.0
    %87 = vmatpush.msra.mxu0 0.0
    %88 = vmatpush.msra.mxu0 0.0
    %89 = vmatpush.msra.mxu0 0.0
    %90 = vmatpush.msra.mxu0 0.0
    %91 = vmatpush.msra.mxu0 0.0
    %92 = vmatpush.msra.mxu0 0.0
    %93 = vmatpush.msra.mxu0 0.0
    %94 = vmatpush.msra.mxu0 0.0
    %95 = vmatpush.msra.mxu0 %v55
    %96 = vmatpush.msra.mxu0 %v48
    %97 = vmatpush.msra.mxu0 %v39
    %98 = vmatmul.f32.gmra.mxu0 %v80
    %v99 = vpop.f32.mrf.mxu0
    %v100 = vadd.f32 %v76, %v99
    %101 = vdwg.mxu0
    %102 = vmatpush.msra.mxu0 0.0
    %103 = vmatpush.msra.mxu0 0.0
    %104 = vmatpush.msra.mxu0 0.0
    %105 = vmatpush.msra.mxu0 0.0
    %106 = vmatpush.msra.mxu0 0.0
    %107 = vmatpush.msra.mxu0 0.0
    %108 = vmatpush.msra.mxu0 0.0
    %109 = vmatpush.msra.mxu0 0.0
    %110 = vmatpush.msra.mxu0 0.0
    %111 = vmatpush.msra.mxu0 0.0
    %112 = vmatpush.msra.mxu0 0.0
    %113 = vmatpush.msra.mxu0 0.0
    %114 = vmatpush.msra.mxu0 0.0
    %115 = vmatpush.msra.mxu0 %v71
    %116 = vmatpush.msra.mxu0 %v65
    %117 = vmatpush.msra.mxu0 %v57
    %118 = vmatmul.f32.gmra.mxu0 %v80
    %v119 = vpop.f32.mrf.mxu0
    %v120 = vadd.f32 %v76, %v119
    %121 = vdwg.mxu0
    %v122 = vlaneseq
    %v123 = vand.u32 %v122, 127
    %vm124 = vcmp.lt.s32.totalorder %v123, 16
    %v125 = vsel %vm124, %v100, 0.0
    %126 = vadd.xlane.f32.xlu0 %v125
    %v127 = vpop.xlane.xlu0 %126
    %v128 = vmul.f32 %v125, %v125
    %129 = vadd.xlane.f32.xlu0 %v128
    %v130 = vpop.xlane.xlu0 %129
    %vm131 = vcmask 7168
    %v132 = vsel %vm131, %v127, 0.0
    %133 = vadd.xlane.f32.xlu0 %v132
    %v134 = vpop.xlane.xlu0 %133
    %v135 = vrot.slane %v134, 4
    %v136 = vadd.f32 %v134, %v135
    %v137 = vrot.slane %v136, 2
    %v138 = vadd.f32 %v136, %v137
    %v139 = vrot.slane %v138, 1
    %v140 = vadd.f32 %v138, %v139
    %s141 = vtos %v140
    %s142 = smul.f32 %s141, 0.0078125
    %v143 = vsel %vm131, %v130, 0.0
    %144 = vadd.xlane.f32.xlu0 %v143
    %v145 = vpop.xlane.xlu0 %144
    %v146 = vrot.slane %v145, 4
    %v147 = vadd.f32 %v145, %v146
    %v148 = vrot.slane %v147, 2
    %v149 = vadd.f32 %v147, %v148
    %v150 = vrot.slane %v149, 1
    %v151 = vadd.f32 %v149, %v150
    %s152 = vtos %v151
    %s153 = smul.f32 %s152, 0.0078125
    %s154 = smul.f32 %s142, %s142
    %s155 = ssub.f32 %s153, %s154
    %s156 = smax.f32 %s155, 0.0
    %v157 = vstv %s142
    %v158 = vsub.f32 %v100, %v157
    %s159 = sadd.f32 %s156, 1e-08
    %v160 = vstv %s159
    %v161 = vrsqrt.pop %v160
    %v162 = vmul.f32 %v161, %v160
    %v163 = vmul.f32 %v162, %v161
    %v164 = vmul.f32 0.5, %v163
    %v165 = vsub.f32 1.5, %v164
    %v166 = vmul.f32 %v161, %v165
    %vm167 = vweird.f32 %v160
    %vm168 = vweird.f32 %v161
    %vm169 = vmor %vm167, %vm168
    %v170 = vsel %vm169, %v161, %v166
    %s171 = vtos %v170
    %v172 = vstv %s171
    %v173 = vmul.f32 %v158, %v172
    %175 = vset.pattern.permute.xlu0 0
    %176 = vperm.xlu0 %175, %v37
    %v177 = vpop.permute.xlu0 %176
    %v179 = vmul.f32 %v177, %v173
    %181 = vset.pattern.permute.xlu0 0
    %182 = vperm.xlu0 %181, %v38
    %v183 = vpop.permute.xlu0 %182
    %v185 = vadd.f32 %v179, %v183
    %186 = vst [vmem:[#allocation5] sm:$0xff] %v185
    %v187 = vsel %vm124, %v120, 0.0
    %188 = vadd.xlane.f32.xlu0 %v187
    %v189 = vpop.xlane.xlu0 %188
    %v190 = vmul.f32 %v187, %v187
    %191 = vadd.xlane.f32.xlu0 %v190
    %v192 = vpop.xlane.xlu0 %191
    %v193 = vsel %vm131, %v189, 0.0
    %194 = vadd.xlane.f32.xlu0 %v193
    %v195 = vpop.xlane.xlu0 %194
    %v196 = vrot.slane %v195, 4
    %v197 = vadd.f32 %v195, %v196
    %v198 = vrot.slane %v197, 2
    %v199 = vadd.f32 %v197, %v198
    %v200 = vrot.slane %v199, 1
    %v201 = vadd.f32 %v199, %v200
    %s202 = vtos %v201
    %s203 = smul.f32 %s202, 0.0078125
    %v204 = vsel %vm131, %v192, 0.0
    %205 = vadd.xlane.f32.xlu0 %v204
    %v206 = vpop.xlane.xlu0 %205
    %v207 = vrot.slane %v206, 4
    %v208 = vadd.f32 %v206, %v207
    %v209 = vrot.slane %v208, 2
    %v210 = vadd.f32 %v208, %v209
    %v211 = vrot.slane %v210, 1
    %v212 = vadd.f32 %v210, %v211
    %s213 = vtos %v212
    %s214 = smul.f32 %s213, 0.0078125
    %s215 = smul.f32 %s203, %s203
    %s216 = ssub.f32 %s214, %s215
    %s217 = smax.f32 %s216, 0.0
    %v218 = vstv %s203
    %v219 = vsub.f32 %v120, %v218
    %s220 = sadd.f32 %s217, 1e-08
    %v221 = vstv %s220
    %v222 = vrsqrt.pop %v221
    %v223 = vmul.f32 %v222, %v221
    %v224 = vmul.f32 %v223, %v222
    %v225 = vmul.f32 0.5, %v224
    %v226 = vsub.f32 1.5, %v225
    %v227 = vmul.f32 %v222, %v226
    %vm228 = vweird.f32 %v221
    %vm229 = vweird.f32 %v222
    %vm230 = vmor %vm228, %vm229
    %v231 = vsel %vm230, %v222, %v227
    %s232 = vtos %v231
    %v233 = vstv %s232
    %v234 = vmul.f32 %v219, %v233
    %v235 = vmul.f32 %v177, %v234
    %v236 = vadd.f32 %v235, %v183
    %237 = vst [vmem:[#allocation5 + $0x8] sm:$0xff] %v236
    // Predicated region
    $region26: #{tpu_custom_call.1} parent=1 // pred_check
      _
    $region27: #{tpu_custom_call.1} parent=1 // pred_check_branch
      %239 = sbr.rel (0) target = $region29
    $region28: #{tpu_custom_call.1} parent=1 // pred_region
      %241 = vsyncadd [#allocation4], 0
      %s243 = sshll.u32 [#allocation5], 4
      %s244 = int_to_ptr.vmem [resolvable:$true] %s243
      %s245 = sshll.u32 %s5, 4
      %s246 = int_to_ptr.hbm [resolvable:$true] %s245
      %248 = dma.vmem_to_hbm [thread:$0]  %s244, 256, %s246, [#allocation4]
    $region29: #{tpu_custom_call.1} parent=1 // pred_fallthru
      _
    // Predicated region
    $region30: #{tpu_custom_call.1} parent=1 // pred_check
      _
    $region31: #{tpu_custom_call.1} parent=1 // pred_check_branch
      %250 = sbr.rel (0) target = $region33
    $region32: #{tpu_custom_call.1} parent=1 // pred_region
      %252 = dma.done [#allocation4], 256
    $region33: #{tpu_custom_call.1} parent=1 // pred_fallthru
      _
    %253 = vsyncpa [#allocation3], 1
    %254 = vsyncpa [#allocation4], 1

</llo_original>
